<compile_context>
chip_gen: v7x
topology: tpu7x:2x2x1
jax: 0.10.0
libtpu: 0.0.40
codegen_flags: <defaults>
</compile_context>

<pallas_src>
import functools

import jax
import jax.numpy as jnp
from jax.experimental import pallas as pl
from jax.experimental.pallas import tpu as pltpu


_VMEM_TILE_BUDGET = 24 * 1024 * 1024   # conservative; leaves headroom on v7x (64 MiB)
_VMEM_LIMIT_BYTES = 48 * 1024 * 1024   # > v5e 16 MiB default, < v7x physical


def _round_up(v, m):
    return (v + m - 1) // m * m


def _pick_d_tile(D, B, itemsize):
    """Largest D-tile (multiple of 128) that divides the padded D and fits VMEM."""
    d_pad = _round_up(D, 128)
    fixed = 16 * B * B * 4  # 3 Gram accumulators + epilogue temporaries (rough)
    for td in (1024, 512, 256, 128):
        # 2 inputs x 2 pipeline buffers per input, each (B, td) in source dtype.
        if d_pad % td == 0 and 4 * B * td * itemsize + fixed <= _VMEM_TILE_BUDGET:
            return td, d_pad
    return 128, d_pad


def _mmd_kernel(x_ref, y_ref, o_ref, xx_acc, yy_acc, zz_acc, *, alpha, beta, gamma):
    k = pl.program_id(0)

    @pl.when(k == 0)
    def _():
        xx_acc[...] = jnp.zeros_like(xx_acc)
        yy_acc[...] = jnp.zeros_like(yy_acc)
        zz_acc[...] = jnp.zeros_like(zz_acc)

    x = x_ref[...]   # (B, TD) in source dtype (f32 or bf16)
    y = y_ref[...]   # (B, TD)

    # Contract over the feature tile on the MXU; accumulate in f32.
    dims = (((1,), (1,)), ((), ()))
    xx_acc[...] += jax.lax.dot_general(x, x, dims, preferred_element_type=jnp.float32)
    yy_acc[...] += jax.lax.dot_general(y, y, dims, preferred_element_type=jnp.float32)
    zz_acc[...] += jax.lax.dot_general(x, y, dims, preferred_element_type=jnp.float32)

    @pl.when(k == pl.num_programs(0) - 1)
    def _():
        xx = xx_acc[...]   # (B, B) f32
        yy = yy_acc[...]
        zz = zz_acc[...]
        b = xx.shape[0]

        # diag(xx)[i] = xx[i, i]  (matches torch's xx.diag()).
        row = jax.lax.broadcasted_iota(jnp.int32, (b, b), 0)
        col = jax.lax.broadcasted_iota(jnp.int32, (b, b), 1)
        eye = row == col
        dx = jnp.sum(jnp.where(eye, xx, 0.0), axis=-1, keepdims=True)   # (B, 1)
        dy = jnp.sum(jnp.where(eye, yy, 0.0), axis=-1, keepdims=True)   # (B, 1)

        # torch: K = exp(-alpha*(rx.t() + rx - 2*xx)), etc.
        K = jnp.exp(-alpha * (dx + dx.T - 2.0 * xx))
        L = jnp.exp(-alpha * (dy + dy.T - 2.0 * yy))
        P = jnp.exp(-alpha * (dx + dy.T - 2.0 * zz))

        sK = jnp.sum(K, keepdims=True)   # (1, 1)
        sL = jnp.sum(L, keepdims=True)
        sP = jnp.sum(P, keepdims=True)
        o_ref[...] = beta * (sK + sL) - gamma * sP


def mmd_loss(x, y, sigma=0.1):
    """Pallas implementation of MMDLoss.forward(x, y)."""
    B = x.shape[0]
    assert y.shape[0] == B, "batch sizes must match"
    assert B > 1, "beta = 1/(B*(B-1)) requires B > 1 (same as the torch module)"

    # Stream in the source dtype: bf16 stays bf16 (halves HBM bytes); anything
    # else is promoted to f32. The MXU accumulates in f32 either way.
    dt = x.dtype
    if dt not in (jnp.dtype(jnp.bfloat16), jnp.dtype(jnp.float32)):
        dt = jnp.dtype(jnp.float32)
    xf = x.reshape(B, -1).astype(dt)
    yf = y.reshape(B, -1).astype(dt)
    assert xf.shape == yf.shape, "flattened feature dims must match (torch.mm)"
    D = xf.shape[1]
    itemsize = jnp.dtype(dt).itemsize

    TD, D_pad = _pick_d_tile(D, B, itemsize)
    if D_pad != D:
        # Zero padding along D does not change any dot product / squared norm.
        pad = ((0, 0), (0, D_pad - D))
        xf = jnp.pad(xf, pad)
        yf = jnp.pad(yf, pad)

    alpha = 1.0 / (2.0 * sigma ** 2)
    beta = 1.0 / (B * (B - 1))
    gamma = 2.0 / (B * B)

    kernel = functools.partial(_mmd_kernel, alpha=alpha, beta=beta, gamma=gamma)

    cost = pl.CostEstimate(
        flops=int(6 * B * B * D_pad),        # 3 Grams x 2 flops/MAC
        transcendentals=int(3 * B * B),      # K, L, P exponentials
        bytes_accessed=int(2 * B * D_pad * itemsize + 4),
    )

    out = pl.pallas_call(
        kernel,
        out_shape=jax.ShapeDtypeStruct((1, 1), jnp.float32),
        grid_spec=pltpu.PrefetchScalarGridSpec(
            num_scalar_prefetch=0,
            grid=(D_pad // TD,),
            in_specs=[
                pl.BlockSpec((B, TD), lambda k: (0, k)),
                pl.BlockSpec((B, TD), lambda k: (0, k)),
            ],
            out_specs=pl.BlockSpec((1, 1), lambda k: (0, 0)),
            scratch_shapes=[
                pltpu.VMEM((B, B), jnp.float32),
                pltpu.VMEM((B, B), jnp.float32),
                pltpu.VMEM((B, B), jnp.float32),
            ],
        ),
        compiler_params=pltpu.CompilerParams(
            dimension_semantics=("arbitrary",),
            vmem_limit_bytes=_VMEM_LIMIT_BYTES,
        ),
        cost_estimate=cost,
    )(xf, yf)
    return out[0, 0]


def _mmd_loss_ref(x, y, sigma=0.1):
    """Pure-JAX reference mirroring the PyTorch module exactly."""
    alpha = 1.0 / (2.0 * sigma ** 2)
    B = x.shape[0]
    xf = x.reshape(B, -1).astype(jnp.float32)
    yf = y.reshape(B, -1).astype(jnp.float32)
    xx = xf @ xf.T
    yy = yf @ yf.T
    zz = xf @ yf.T
    rx = jnp.broadcast_to(jnp.diag(xx)[None, :], xx.shape)
    ry = jnp.broadcast_to(jnp.diag(yy)[None, :], yy.shape)
    K = jnp.exp(-alpha * (rx.T + rx - 2.0 * xx))
    L = jnp.exp(-alpha * (ry.T + ry - 2.0 * yy))
    P = jnp.exp(-alpha * (rx.T + ry - 2.0 * zz))
    beta = 1.0 / (B * (B - 1))
    gamma = 2.0 / (B * B)
    return beta * (jnp.sum(K) + jnp.sum(L)) - gamma * jnp.sum(P)


if __name__ == "__main__":
    key = jax.random.PRNGKey(0)
    k1, k2, k3, k4 = jax.random.split(key, 4)

    # Case 1: NCHW input matching the module; D = 4*16*16 = 1024 (single/large
    # D-tile), B = 2. Scaled so the RBF kernel is not saturated.
    x1 = 0.005 * jax.random.normal(k1, (2, 4, 16, 16), dtype=jnp.float32)
    y1 = 0.005 * jax.random.normal(k2, (2, 4, 16, 16), dtype=jnp.float32)
    out1 = jax.block_until_ready(mmd_loss(x1, y1, sigma=0.1))
    ref1 = jax.block_until_ready(_mmd_loss_ref(x1, y1, sigma=0.1))
    assert jnp.allclose(out1, ref1, rtol=1e-4, atol=1e-5), (out1, ref1)

    # Case 2: B = 4 (not a multiple of 8), D = 3*10*10 = 300 (not a multiple of
    # 128) -> exercises zero-padding and a multi-step D-reduction grid.
    x2 = 0.01 * jax.random.normal(k3, (4, 3, 10, 10), dtype=jnp.float32)
    y2 = 0.01 * jax.random.normal(k4, (4, 3, 10, 10), dtype=jnp.float32)
    out2 = jax.block_until_ready(mmd_loss(x2, y2, sigma=0.2))
    ref2 = jax.block_until_ready(_mmd_loss_ref(x2, y2, sigma=0.2))
    assert jnp.allclose(out2, ref2, rtol=1e-4, atol=1e-5), (out2, ref2)

    print("KERNEL_OK")
</pallas_src>

<mosaic_0001>
module attributes {stable_mosaic.version = 11 : i64} {
  func.func @_mmd_kernel(%arg0: i32, %arg1: memref<2x1024xf32, #tpu.memory_space<vmem>>, %arg2: memref<2x1024xf32, #tpu.memory_space<vmem>>, %arg3: memref<1x1xf32, #tpu.memory_space<vmem>>, %arg4: memref<2x2xf32, #tpu.memory_space<vmem>>, %arg5: memref<2x2xf32, #tpu.memory_space<vmem>>, %arg6: memref<2x2xf32, #tpu.memory_space<vmem>>) attributes {dimension_semantics = [#tpu.dimension_semantics<arbitrary>], iteration_bounds = array<i64: 1>, scalar_prefetch = 0 : i64, scratch_operands = 3 : i64, tpu.core_type = #tpu.core_type<tc>, window_params = [{transform_indices = @transform_0, window_bounds = array<i64: 2, 1024>}, {transform_indices = @transform_1, window_bounds = array<i64: 2, 1024>}, {pipeline_mode = #tpu.pipeline_mode<synchronous>, transform_indices = @transform_2, window_bounds = array<i64: 1, 1>}]} {
    %c0_i32 = arith.constant 0 : i32
    %0 = arith.cmpi eq, %arg0, %c0_i32 : i32
    %1 = arith.extui %0 : i1 to i32
    %c0_i32_0 = arith.constant 0 : i32
    %2 = arith.cmpi ne, %1, %c0_i32_0 : i32
    scf.if %2 {
      %cst_20 = arith.constant 0.000000e+00 : f32
      %20 = vector.broadcast %cst_20 : f32 to vector<2x2xf32>
      %c0_21 = arith.constant 0 : index
      %c0_22 = arith.constant 0 : index
      %21 = vector.load %arg4[%c0_21, %c0_22] : memref<2x2xf32, #tpu.memory_space<vmem>>, vector<2x2xf32>
      tpu.vector_store %arg4[%c0_21, %c0_22], %20 {strides = array<i32>} : memref<2x2xf32, #tpu.memory_space<vmem>>, vector<2x2xf32>,
      %cst_23 = arith.constant 0.000000e+00 : f32
      %22 = vector.broadcast %cst_23 : f32 to vector<2x2xf32>
      %c0_24 = arith.constant 0 : index
      %c0_25 = arith.constant 0 : index
      %23 = vector.load %arg5[%c0_24, %c0_25] : memref<2x2xf32, #tpu.memory_space<vmem>>, vector<2x2xf32>
      tpu.vector_store %arg5[%c0_24, %c0_25], %22 {strides = array<i32>} : memref<2x2xf32, #tpu.memory_space<vmem>>, vector<2x2xf32>,
      %cst_26 = arith.constant 0.000000e+00 : f32
      %24 = vector.broadcast %cst_26 : f32 to vector<2x2xf32>
      %c0_27 = arith.constant 0 : index
      %c0_28 = arith.constant 0 : index
      %25 = vector.load %arg6[%c0_27, %c0_28] : memref<2x2xf32, #tpu.memory_space<vmem>>, vector<2x2xf32>
      tpu.vector_store %arg6[%c0_27, %c0_28], %24 {strides = array<i32>} : memref<2x2xf32, #tpu.memory_space<vmem>>, vector<2x2xf32>,
    } else {
    }
    %c0 = arith.constant 0 : index
    %c0_1 = arith.constant 0 : index
    %3 = vector.load %arg1[%c0, %c0_1] : memref<2x1024xf32, #tpu.memory_space<vmem>>, vector<2x1024xf32>
    %c0_2 = arith.constant 0 : index
    %c0_3 = arith.constant 0 : index
    %4 = vector.load %arg2[%c0_2, %c0_3] : memref<2x1024xf32, #tpu.memory_space<vmem>>, vector<2x1024xf32>
    %c0_4 = arith.constant 0 : index
    %c0_5 = arith.constant 0 : index
    %5 = vector.load %arg4[%c0_4, %c0_5] : memref<2x2xf32, #tpu.memory_space<vmem>>, vector<2x2xf32>
    %cst = arith.constant dense<0.000000e+00> : vector<2x2xf32>
    %6 = tpu.matmul %3, %3, %cst {dimension_numbers = #tpu.dot_dimension_numbers<[1], [1], [0], [0], [0, 0, 1, 0], [], []>} : vector<2x1024xf32>, vector<2x1024xf32>, vector<2x2xf32> -> vector<2x2xf32>
    %7 = arith.addf %5, %6 : vector<2x2xf32>
    %c0_6 = arith.constant 0 : index
    %c0_7 = arith.constant 0 : index
    %8 = vector.load %arg4[%c0_6, %c0_7] : memref<2x2xf32, #tpu.memory_space<vmem>>, vector<2x2xf32>
    tpu.vector_store %arg4[%c0_6, %c0_7], %7 {strides = array<i32>} : memref<2x2xf32, #tpu.memory_space<vmem>>, vector<2x2xf32>,
    %c0_8 = arith.constant 0 : index
    %c0_9 = arith.constant 0 : index
    %9 = vector.load %arg5[%c0_8, %c0_9] : memref<2x2xf32, #tpu.memory_space<vmem>>, vector<2x2xf32>
    %cst_10 = arith.constant dense<0.000000e+00> : vector<2x2xf32>
    %10 = tpu.matmul %4, %4, %cst_10 {dimension_numbers = #tpu.dot_dimension_numbers<[1], [1], [0], [0], [0, 0, 1, 0], [], []>} : vector<2x1024xf32>, vector<2x1024xf32>, vector<2x2xf32> -> vector<2x2xf32>
    %11 = arith.addf %9, %10 : vector<2x2xf32>
    %c0_11 = arith.constant 0 : index
    %c0_12 = arith.constant 0 : index
    %12 = vector.load %arg5[%c0_11, %c0_12] : memref<2x2xf32, #tpu.memory_space<vmem>>, vector<2x2xf32>
    tpu.vector_store %arg5[%c0_11, %c0_12], %11 {strides = array<i32>} : memref<2x2xf32, #tpu.memory_space<vmem>>, vector<2x2xf32>,
    %c0_13 = arith.constant 0 : index
    %c0_14 = arith.constant 0 : index
    %13 = vector.load %arg6[%c0_13, %c0_14] : memref<2x2xf32, #tpu.memory_space<vmem>>, vector<2x2xf32>
    %cst_15 = arith.constant dense<0.000000e+00> : vector<2x2xf32>
    %14 = tpu.matmul %3, %4, %cst_15 {dimension_numbers = #tpu.dot_dimension_numbers<[1], [1], [0], [0], [0, 0, 1, 0], [], []>} : vector<2x1024xf32>, vector<2x1024xf32>, vector<2x2xf32> -> vector<2x2xf32>
    %15 = arith.addf %13, %14 : vector<2x2xf32>
    %c0_16 = arith.constant 0 : index
    %c0_17 = arith.constant 0 : index
    %16 = vector.load %arg6[%c0_16, %c0_17] : memref<2x2xf32, #tpu.memory_space<vmem>>, vector<2x2xf32>
    tpu.vector_store %arg6[%c0_16, %c0_17], %15 {strides = array<i32>} : memref<2x2xf32, #tpu.memory_space<vmem>>, vector<2x2xf32>,
    %c0_i32_18 = arith.constant 0 : i32
    %17 = arith.cmpi eq, %arg0, %c0_i32_18 : i32
    %18 = arith.extui %17 : i1 to i32
    %c0_i32_19 = arith.constant 0 : i32
    %19 = arith.cmpi ne, %18, %c0_i32_19 : i32
    scf.if %19 {
      %c0_20 = arith.constant 0 : index
      %c0_21 = arith.constant 0 : index
      %20 = vector.load %arg4[%c0_20, %c0_21] : memref<2x2xf32, #tpu.memory_space<vmem>>, vector<2x2xf32>
      %c0_22 = arith.constant 0 : index
      %c0_23 = arith.constant 0 : index
      %21 = vector.load %arg5[%c0_22, %c0_23] : memref<2x2xf32, #tpu.memory_space<vmem>>, vector<2x2xf32>
      %c0_24 = arith.constant 0 : index
      %c0_25 = arith.constant 0 : index
      %22 = vector.load %arg6[%c0_24, %c0_25] : memref<2x2xf32, #tpu.memory_space<vmem>>, vector<2x2xf32>
      %23 = tpu.iota {dimensions = array<i32: 0>} : vector<2x2xi32>
      %24 = tpu.iota {dimensions = array<i32: 1>} : vector<2x2xi32>
      %25 = arith.cmpi eq, %23, %24 : vector<2x2xi32>
      %cst_26 = arith.constant 0.000000e+00 : f32
      %26 = vector.broadcast %cst_26 : f32 to vector<2x2xf32>
      %27 = arith.select %25, %20, %26 : vector<2x2xi1>, vector<2x2xf32>
      %cst_27 = arith.constant dense<0.000000e+00> : vector<2xf32>
      %28 = vector.multi_reduction <add>, %27, %cst_27 [1] : vector<2x2xf32> to vector<2xf32>
      %29 = vector.shape_cast %28 : vector<2xf32> to vector<2x1xf32>
      %cst_28 = arith.constant 0.000000e+00 : f32
      %30 = vector.broadcast %cst_28 : f32 to vector<2x2xf32>
      %31 = arith.select %25, %21, %30 : vector<2x2xi1>, vector<2x2xf32>
      %cst_29 = arith.constant dense<0.000000e+00> : vector<2xf32>
      %32 = vector.multi_reduction <add>, %31, %cst_29 [1] : vector<2x2xf32> to vector<2xf32>
      %33 = vector.shape_cast %32 : vector<2xf32> to vector<2x1xf32>
      %34 = tpu.transpose %29, [1, 0] : vector<2x1xf32> -> vector<1x2xf32>
      %35 = vector.broadcast %29 : vector<2x1xf32> to vector<2x2xf32>
      %36 = vector.broadcast %34 : vector<1x2xf32> to vector<2x2xf32>
      %37 = arith.addf %35, %36 : vector<2x2xf32>
      %cst_30 = arith.constant 2.000000e+00 : f32
      %38 = vector.broadcast %cst_30 : f32 to vector<2x2xf32>
      %39 = arith.mulf %38, %20 : vector<2x2xf32>
      %40 = arith.subf %37, %39 : vector<2x2xf32>
      %cst_31 = arith.constant -5.000000e+01 : f32
      %41 = vector.broadcast %cst_31 : f32 to vector<2x2xf32>
      %42 = arith.mulf %41, %40 : vector<2x2xf32>
      %43 = math.exp %42 : vector<2x2xf32>
      %44 = tpu.transpose %33, [1, 0] : vector<2x1xf32> -> vector<1x2xf32>
      %45 = vector.broadcast %33 : vector<2x1xf32> to vector<2x2xf32>
      %46 = vector.broadcast %44 : vector<1x2xf32> to vector<2x2xf32>
      %47 = arith.addf %45, %46 : vector<2x2xf32>
      %cst_32 = arith.constant 2.000000e+00 : f32
      %48 = vector.broadcast %cst_32 : f32 to vector<2x2xf32>
      %49 = arith.mulf %48, %21 : vector<2x2xf32>
      %50 = arith.subf %47, %49 : vector<2x2xf32>
      %cst_33 = arith.constant -5.000000e+01 : f32
      %51 = vector.broadcast %cst_33 : f32 to vector<2x2xf32>
      %52 = arith.mulf %51, %50 : vector<2x2xf32>
      %53 = math.exp %52 : vector<2x2xf32>
      %54 = tpu.transpose %33, [1, 0] : vector<2x1xf32> -> vector<1x2xf32>
      %55 = vector.broadcast %29 : vector<2x1xf32> to vector<2x2xf32>
      %56 = vector.broadcast %54 : vector<1x2xf32> to vector<2x2xf32>
      %57 = arith.addf %55, %56 : vector<2x2xf32>
      %cst_34 = arith.constant 2.000000e+00 : f32
      %58 = vector.broadcast %cst_34 : f32 to vector<2x2xf32>
      %59 = arith.mulf %58, %22 : vector<2x2xf32>
      %60 = arith.subf %57, %59 : vector<2x2xf32>
      %cst_35 = arith.constant -5.000000e+01 : f32
      %61 = vector.broadcast %cst_35 : f32 to vector<2x2xf32>
      %62 = arith.mulf %61, %60 : vector<2x2xf32>
      %63 = math.exp %62 : vector<2x2xf32>
      %64 = vector.shape_cast %43 : vector<2x2xf32> to vector<1x2x2xf32>
      %cst_36 = arith.constant dense<0.000000e+00> : vector<1xf32>
      %65 = vector.multi_reduction <add>, %64, %cst_36 [1, 2] : vector<1x2x2xf32> to vector<1xf32>
      %66 = vector.shape_cast %65 : vector<1xf32> to vector<1x1x1xf32>
      %67 = vector.extract %66[0, 0, 0] : f32 from vector<1x1x1xf32>
      %68 = vector.broadcast %67 : f32 to vector<1x1xf32>
      %69 = vector.shape_cast %53 : vector<2x2xf32> to vector<1x2x2xf32>
      %cst_37 = arith.constant dense<0.000000e+00> : vector<1xf32>
      %70 = vector.multi_reduction <add>, %69, %cst_37 [1, 2] : vector<1x2x2xf32> to vector<1xf32>
      %71 = vector.shape_cast %70 : vector<1xf32> to vector<1x1x1xf32>
      %72 = vector.extract %71[0, 0, 0] : f32 from vector<1x1x1xf32>
      %73 = vector.broadcast %72 : f32 to vector<1x1xf32>
      %74 = vector.shape_cast %63 : vector<2x2xf32> to vector<1x2x2xf32>
      %cst_38 = arith.constant dense<0.000000e+00> : vector<1xf32>
      %75 = vector.multi_reduction <add>, %74, %cst_38 [1, 2] : vector<1x2x2xf32> to vector<1xf32>
      %76 = vector.shape_cast %75 : vector<1xf32> to vector<1x1x1xf32>
      %77 = vector.extract %76[0, 0, 0] : f32 from vector<1x1x1xf32>
      %78 = vector.broadcast %77 : f32 to vector<1x1xf32>
      %79 = arith.addf %68, %73 : vector<1x1xf32>
      %cst_39 = arith.constant 5.000000e-01 : f32
      %80 = vector.broadcast %cst_39 : f32 to vector<1x1xf32>
      %81 = arith.mulf %80, %79 : vector<1x1xf32>
      %cst_40 = arith.constant 5.000000e-01 : f32
      %82 = vector.broadcast %cst_40 : f32 to vector<1x1xf32>
      %83 = arith.mulf %82, %78 : vector<1x1xf32>
      %84 = arith.subf %81, %83 : vector<1x1xf32>
      %c0_41 = arith.constant 0 : index
      %c0_42 = arith.constant 0 : index
      %85 = vector.load %arg3[%c0_41, %c0_42] : memref<1x1xf32, #tpu.memory_space<vmem>>, vector<1x1xf32>
      tpu.vector_store %arg3[%c0_41, %c0_42], %84 {strides = array<i32>} : memref<1x1xf32, #tpu.memory_space<vmem>>, vector<1x1xf32>,
    } else {
    }
    return
  }
  func.func @transform_0(%arg0: i32) -> (i32, i32) {
    %c0_i32 = arith.constant 0 : i32
    %c0_i32_0 = arith.constant 0 : i32
    return %c0_i32, %arg0 : i32, i32
  }
  func.func @transform_1(%arg0: i32) -> (i32, i32) {
    %c0_i32 = arith.constant 0 : i32
    %c0_i32_0 = arith.constant 0 : i32
    return %c0_i32, %arg0 : i32, i32
  }
  func.func @transform_2(%arg0: i32) -> (i32, i32) {
    %c0_i32 = arith.constant 0 : i32
    %c0_i32_0 = arith.constant 0 : i32
    %c0_i32_1 = arith.constant 0 : i32
    return %c0_i32, %c0_i32_0 : i32, i32
  }
}

</mosaic_0001>

<llo_original>
// kernel: tpu_custom_call.1
$region0: #{tpu_custom_call.1}
  #allocation0 [shape = 'u32[]', space=smem, size = 0x4, offset = 0x4, fixed_abs, tag = 'smem constant byte address 0x4 - core index']
  #allocation1 [shape = 'u32[144,128]{1,0:T(1,128)}', space=vmem, size = 0x12000, scoped, tag = 'internal scratch']
  #allocation2 [shape = 'f32[2,2]{1,0:T(2,128)}', space=vmem, size = 0x400, scoped, tag = 'scratch operand']
  #allocation3 [shape = 'f32[2,2]{1,0:T(2,128)}', space=vmem, size = 0x400, scoped, tag = 'scratch operand']
  #allocation4 [shape = 'f32[2,2]{1,0:T(2,128)}', space=vmem, size = 0x400, scoped, tag = 'scratch operand']
  %s0 = inlined_call_operand.hbm [shape: f32[2,1024], index: 0, kind: input, shape index: {}]
  %s1 = inlined_call_operand.hbm [shape: f32[2,1024], index: 1, kind: input, shape index: {}]
  %s2 = inlined_call_operand.hbm [shape: f32[1,1], index: 2, kind: output, shape index: {}]
  %s3 = sld [smem:[#allocation0]]
  $region34: #{tpu_custom_call.1} parent=0
    _
  %s5 = ssub.s32 1, %s3
  %s6 = scalar_select 0, %s5, %s3
  $region1: #{tpu_custom_call.1} parent=0
    #allocation5 [shape = 'u8[8192]{0}', space=vmem, size = 0x2000, scoped, tag = 'input window, operand 0, single buffered']
    #allocation6 [shape = 's32[1]{0}', space=sflag, size = 0x4, scoped, tag = 'scoped memory for tpu_custom_call.1']
    #allocation7 [shape = 's32[1]{0}', space=sflag, size = 0x4, scoped, tag = 'scoped memory for tpu_custom_call.1']
    #allocation8 [shape = 'u8[8192]{0}', space=vmem, size = 0x2000, scoped, tag = 'input window, operand 1, single buffered']
    #allocation9 [shape = 's32[1]{0}', space=sflag, size = 0x4, scoped, tag = 'scoped memory for tpu_custom_call.1']
    #allocation10 [shape = 'u8[512]{0}', space=vmem, size = 0x400, scoped, tag = 'output window, operand 0, single buffered']
    %7 = vsyncpa [#allocation6], 0
    %8 = vsyncpa [#allocation9], 0
    %9 = vsyncpa [#allocation7], 0
    // Predicated region
    $region2: #{tpu_custom_call.1} parent=1 // pred_check
      _
    $region3: #{tpu_custom_call.1} parent=1 // pred_check_branch
      %11 = sbr.rel (0) target = $region5
    $region4: #{tpu_custom_call.1} parent=1 // pred_region
      %s13 = ssub.s32 256, 256
      %14 = vsyncadd [#allocation6], %s13
      %s16 = sshll.u32 [#allocation5], 4
      %s17 = int_to_ptr.vmem [resolvable:$true] %s16
      %19 = dma.hbm_to_vmem [thread:$0]  %s0, 256, %s17, [#allocation6]
    $region5: #{tpu_custom_call.1} parent=1 // pred_fallthru
      _
    // Predicated region
    $region6: #{tpu_custom_call.1} parent=1 // pred_check
      _
    $region7: #{tpu_custom_call.1} parent=1 // pred_check_branch
      %21 = sbr.rel (0) target = $region9
    $region8: #{tpu_custom_call.1} parent=1 // pred_region
      %s23 = ssub.s32 256, 256
      %24 = vsyncadd [#allocation9], %s23
      %s26 = sshll.u32 [#allocation8], 4
      %s27 = int_to_ptr.vmem [resolvable:$true] %s26
      %29 = dma.hbm_to_vmem [thread:$0]  %s1, 256, %s27, [#allocation9]
    $region9: #{tpu_custom_call.1} parent=1 // pred_fallthru
      _
    // Predicated region
    $region10: #{tpu_custom_call.1} parent=1 // pred_check
      _
    $region11: #{tpu_custom_call.1} parent=1 // pred_check_branch
      %31 = sbr.rel (0) target = $region13
    $region12: #{tpu_custom_call.1} parent=1 // pred_region
      %32 = dma.done [#allocation6], 256
    $region13: #{tpu_custom_call.1} parent=1 // pred_fallthru
      _
    // Predicated region
    $region14: #{tpu_custom_call.1} parent=1 // pred_check
      _
    $region15: #{tpu_custom_call.1} parent=1 // pred_check_branch
      %34 = sbr.rel (0) target = $region17
    $region16: #{tpu_custom_call.1} parent=1 // pred_region
      %35 = dma.done [#allocation9], 256
    $region17: #{tpu_custom_call.1} parent=1 // pred_fallthru
      _
    %p36 = scmp.eq.s32.totalorder 0, 0
    // Predicated region
    $region18: #{tpu_custom_call.1} parent=1 // pred_check
      %p37 = pneg %p36
    $region19: #{tpu_custom_call.1} parent=1 // pred_check_branch
      %39 = sbr.rel (%p37) target = $region21
    $region20: #{tpu_custom_call.1} parent=1 // pred_region
      %vm40 = vcmask 9216
      %41 = vst.msk [vmem:[#allocation2] sm:$0x3] %vm40, 0.0
      %42 = vst.msk [vmem:[#allocation3] sm:$0x3] %vm40, 0.0
      %43 = vst.msk [vmem:[#allocation4] sm:$0x3] %vm40, 0.0
    $region21: #{tpu_custom_call.1} parent=1 // pred_fallthru
      _
    %v44 = vld [vmem:[#allocation5] sm:$0xff]
    %v45 = vld [vmem:[#allocation5 + $0x8] sm:$0xff]
    %v46 = vld [vmem:[#allocation8] sm:$0xff]
    %v47 = vld [vmem:[#allocation8 + $0x8] sm:$0xff]
    %v48 = vld [vmem:[#allocation2] sm:$0x3]
    %v51 = vcombine.high %v44, %v44
    %v53 = vunpack.c.l.s4 1983009808
    %v54 = vunpack.c.0.s8 %v53
    %v55 = vlaneseq
    %v56 = vshrl.u32 %v55, 7
    %v57 = vsub.s32 %v54, %v56
    %v58 = vrot.slane %v44, %v57
    %v60 = vunpack.c.l.s4 1983009808
    %v61 = vunpack.c.0.s8 %v60
    %v62 = vlaneseq
    %v63 = vshrl.u32 %v62, 7
    %v64 = vsub.s32 %v61, %v63
    %v65 = vrot.slane %v51, %v64
    %v66 = vcombine.high %v58, %v58
    %v67 = vcombine.high %v65, %v65
    %v68 = vcombine.high %v45, %v45
    %v70 = vunpack.c.l.s4 1983009808
    %v71 = vunpack.c.0.s8 %v70
    %v72 = vlaneseq
    %v73 = vshrl.u32 %v72, 7
    %v74 = vsub.s32 %v71, %v73
    %v75 = vrot.slane %v45, %v74
    %v77 = vunpack.c.l.s4 1983009808
    %v78 = vunpack.c.0.s8 %v77
    %v79 = vlaneseq
    %v80 = vshrl.u32 %v79, 7
    %v81 = vsub.s32 %v78, %v80
    %v82 = vrot.slane %v68, %v81
    %v83 = vcombine.high %v75, %v75
    %v84 = vcombine.high %v82, %v82
    %93 = vmatprep.subr.mxu0 %v66
    %94 = vmatpush1.xpose.msra.mxu0 %v58
    %95 = vmatprep.subr.mxu0 0.0
    %96 = vmatpush1.xpose.msra.mxu0 0.0
    %97 = vmatprep.subr.mxu0 0.0
    %98 = vmatpush1.xpose.msra.mxu0 0.0
    %99 = vmatprep.subr.mxu0 0.0
    %100 = vmatpush1.xpose.msra.mxu0 0.0
    %101 = vmatprep.subr.mxu0 0.0
    %102 = vmatpush1.xpose.msra.mxu0 0.0
    %103 = vmatprep.subr.mxu0 0.0
    %104 = vmatpush1.xpose.msra.mxu0 0.0
    %105 = vmatprep.subr.mxu0 0.0
    %106 = vmatpush1.xpose.msra.mxu0 0.0
    %107 = vmatprep.subr.mxu0 0.0
    %108 = vmatpush1.xpose.msra.mxu0 0.0
    %109 = vmatprep.subr.mxu0 0.0
    %110 = vmatpush1.xpose.msra.mxu0 0.0
    %111 = vmatprep.subr.mxu0 0.0
    %112 = vmatpush1.xpose.msra.mxu0 0.0
    %113 = vmatprep.subr.mxu0 0.0
    %114 = vmatpush1.xpose.msra.mxu0 0.0
    %115 = vmatprep.subr.mxu0 0.0
    %116 = vmatpush1.xpose.msra.mxu0 0.0
    %117 = vmatprep.subr.mxu0 0.0
    %118 = vmatpush1.xpose.msra.mxu0 0.0
    %119 = vmatprep.subr.mxu0 0.0
    %120 = vmatpush1.xpose.msra.mxu0 0.0
    %121 = vmatprep.subr.mxu0 0.0
    %122 = vmatpush1.xpose.msra.mxu0 0.0
    %123 = vmatprep.subr.mxu0 0.0
    %124 = vmatpush1.xpose.msra.mxu0 0.0
    %125 = vmatprep.subr.mxu0 0.0
    %126 = vmatpush1.xpose.msra.mxu0 0.0
    %127 = vmatprep.subr.mxu0 0.0
    %128 = vmatpush1.xpose.msra.mxu0 0.0
    %129 = vmatprep.subr.mxu0 0.0
    %130 = vmatpush1.xpose.msra.mxu0 0.0
    %131 = vmatprep.subr.mxu0 0.0
    %132 = vmatpush1.xpose.msra.mxu0 0.0
    %133 = vmatprep.subr.mxu0 0.0
    %134 = vmatpush1.xpose.msra.mxu0 0.0
    %135 = vmatprep.subr.mxu0 0.0
    %136 = vmatpush1.xpose.msra.mxu0 0.0
    %137 = vmatprep.subr.mxu0 0.0
    %138 = vmatpush1.xpose.msra.mxu0 0.0
    %139 = vmatprep.subr.mxu0 0.0
    %140 = vmatpush1.xpose.msra.mxu0 0.0
    %141 = vmatprep.subr.mxu0 0.0
    %142 = vmatpush1.xpose.msra.mxu0 0.0
    %143 = vmatprep.subr.mxu0 0.0
    %144 = vmatpush1.xpose.msra.mxu0 0.0
    %145 = vmatprep.subr.mxu0 0.0
    %146 = vmatpush1.xpose.msra.mxu0 0.0
    %147 = vmatprep.subr.mxu0 0.0
    %148 = vmatpush1.xpose.msra.mxu0 0.0
    %149 = vmatprep.subr.mxu0 0.0
    %150 = vmatpush1.xpose.msra.mxu0 0.0
    %151 = vmatprep.subr.mxu0 0.0
    %152 = vmatpush1.xpose.msra.mxu0 0.0
    %153 = vmatprep.subr.mxu0 0.0
    %154 = vmatpush1.xpose.msra.mxu0 0.0
    %155 = vmatprep.subr.mxu0 0.0
    %156 = vmatpush1.xpose.msra.mxu0 0.0
    %157 = vmatprep.mubr.f32.mxu0 %v66
    %158 = vmatmul.mubr.f32.gmra.mrb[0].mxu0 %v58
    %v159 = vpop.f32.mrb[0].mxu0
    %v160 = vadd.f32 0.0, %v159
    %v161 = vpop.f32.mrb[0].mxu0
    %162 = vdwg.mxu0
    %163 = vmatprep.subr.mxu0 %v67
    %164 = vmatpush1.xpose.msra.mxu0 %v65
    %165 = vmatprep.subr.mxu0 0.0
    %166 = vmatpush1.xpose.msra.mxu0 0.0
    %167 = vmatprep.subr.mxu0 0.0
    %168 = vmatpush1.xpose.msra.mxu0 0.0
    %169 = vmatprep.subr.mxu0 0.0
    %170 = vmatpush1.xpose.msra.mxu0 0.0
    %171 = vmatprep.subr.mxu0 0.0
    %172 = vmatpush1.xpose.msra.mxu0 0.0
    %173 = vmatprep.subr.mxu0 0.0
    %174 = vmatpush1.xpose.msra.mxu0 0.0
    %175 = vmatprep.subr.mxu0 0.0
    %176 = vmatpush1.xpose.msra.mxu0 0.0
    %177 = vmatprep.subr.mxu0 0.0
    %178 = vmatpush1.xpose.msra.mxu0 0.0
    %179 = vmatprep.subr.mxu0 0.0
    %180 = vmatpush1.xpose.msra.mxu0 0.0
    %181 = vmatprep.subr.mxu0 0.0
    %182 = vmatpush1.xpose.msra.mxu0 0.0
    %183 = vmatprep.subr.mxu0 0.0
    %184 = vmatpush1.xpose.msra.mxu0 0.0
    %185 = vmatprep.subr.mxu0 0.0
    %186 = vmatpush1.xpose.msra.mxu0 0.0
    %187 = vmatprep.subr.mxu0 0.0
    %188 = vmatpush1.xpose.msra.mxu0 0.0
    %189 = vmatprep.subr.mxu0 0.0
    %190 = vmatpush1.xpose.msra.mxu0 0.0
    %191 = vmatprep.subr.mxu0 0.0
    %192 = vmatpush1.xpose.msra.mxu0 0.0
    %193 = vmatprep.subr.mxu0 0.0
    %194 = vmatpush1.xpose.msra.mxu0 0.0
    %195 = vmatprep.subr.mxu0 0.0
    %196 = vmatpush1.xpose.msra.mxu0 0.0
    %197 = vmatprep.subr.mxu0 0.0
    %198 = vmatpush1.xpose.msra.mxu0 0.0
    %199 = vmatprep.subr.mxu0 0.0
    %200 = vmatpush1.xpose.msra.mxu0 0.0
    %201 = vmatprep.subr.mxu0 0.0
    %202 = vmatpush1.xpose.msra.mxu0 0.0
    %203 = vmatprep.subr.mxu0 0.0
    %204 = vmatpush1.xpose.msra.mxu0 0.0
    %205 = vmatprep.subr.mxu0 0.0
    %206 = vmatpush1.xpose.msra.mxu0 0.0
    %207 = vmatprep.subr.mxu0 0.0
    %208 = vmatpush1.xpose.msra.mxu0 0.0
    %209 = vmatprep.subr.mxu0 0.0
    %210 = vmatpush1.xpose.msra.mxu0 0.0
    %211 = vmatprep.subr.mxu0 0.0
    %212 = vmatpush1.xpose.msra.mxu0 0.0
    %213 = vmatprep.subr.mxu0 0.0
    %214 = vmatpush1.xpose.msra.mxu0 0.0
    %215 = vmatprep.subr.mxu0 0.0
    %216 = vmatpush1.xpose.msra.mxu0 0.0
    %217 = vmatprep.subr.mxu0 0.0
    %218 = vmatpush1.xpose.msra.mxu0 0.0
    %219 = vmatprep.subr.mxu0 0.0
    %220 = vmatpush1.xpose.msra.mxu0 0.0
    %221 = vmatprep.subr.mxu0 0.0
    %222 = vmatpush1.xpose.msra.mxu0 0.0
    %223 = vmatprep.subr.mxu0 0.0
    %224 = vmatpush1.xpose.msra.mxu0 0.0
    %225 = vmatprep.subr.mxu0 0.0
    %226 = vmatpush1.xpose.msra.mxu0 0.0
    %227 = vmatprep.mubr.f32.mxu0 %v67
    %228 = vmatmul.mubr.f32.gmra.mrb[0].mxu0 %v65
    %v229 = vpop.f32.mrb[0].mxu0
    %v230 = vadd.f32 %v160, %v229
    %v231 = vpop.f32.mrb[0].mxu0
    %232 = vdwg.mxu0
    %233 = vmatprep.subr.mxu0 %v83
    %234 = vmatpush1.xpose.msra.mxu0 %v75
    %235 = vmatprep.subr.mxu0 0.0
    %236 = vmatpush1.xpose.msra.mxu0 0.0
    %237 = vmatprep.subr.mxu0 0.0
    %238 = vmatpush1.xpose.msra.mxu0 0.0
    %239 = vmatprep.subr.mxu0 0.0
    %240 = vmatpush1.xpose.msra.mxu0 0.0
    %241 = vmatprep.subr.mxu0 0.0
    %242 = vmatpush1.xpose.msra.mxu0 0.0
    %243 = vmatprep.subr.mxu0 0.0
    %244 = vmatpush1.xpose.msra.mxu0 0.0
    %245 = vmatprep.subr.mxu0 0.0
    %246 = vmatpush1.xpose.msra.mxu0 0.0
    %247 = vmatprep.subr.mxu0 0.0
    %248 = vmatpush1.xpose.msra.mxu0 0.0
    %249 = vmatprep.subr.mxu0 0.0
    %250 = vmatpush1.xpose.msra.mxu0 0.0
    %251 = vmatprep.subr.mxu0 0.0
    %252 = vmatpush1.xpose.msra.mxu0 0.0
    %253 = vmatprep.subr.mxu0 0.0
    %254 = vmatpush1.xpose.msra.mxu0 0.0
    %255 = vmatprep.subr.mxu0 0.0
    %256 = vmatpush1.xpose.msra.mxu0 0.0
    %257 = vmatprep.subr.mxu0 0.0
    %258 = vmatpush1.xpose.msra.mxu0 0.0
    %259 = vmatprep.subr.mxu0 0.0
    %260 = vmatpush1.xpose.msra.mxu0 0.0
    %261 = vmatprep.subr.mxu0 0.0
    %262 = vmatpush1.xpose.msra.mxu0 0.0
    %263 = vmatprep.subr.mxu0 0.0
    %264 = vmatpush1.xpose.msra.mxu0 0.0
    %265 = vmatprep.subr.mxu0 0.0
    %266 = vmatpush1.xpose.msra.mxu0 0.0
    %267 = vmatprep.subr.mxu0 0.0
    %268 = vmatpush1.xpose.msra.mxu0 0.0
    %269 = vmatprep.subr.mxu0 0.0
    %270 = vmatpush1.xpose.msra.mxu0 0.0
    %271 = vmatprep.subr.mxu0 0.0
    %272 = vmatpush1.xpose.msra.mxu0 0.0
    %273 = vmatprep.subr.mxu0 0.0
    %274 = vmatpush1.xpose.msra.mxu0 0.0
    %275 = vmatprep.subr.mxu0 0.0
    %276 = vmatpush1.xpose.msra.mxu0 0.0
    %277 = vmatprep.subr.mxu0 0.0
    %278 = vmatpush1.xpose.msra.mxu0 0.0
    %279 = vmatprep.subr.mxu0 0.0
    %280 = vmatpush1.xpose.msra.mxu0 0.0
    %281 = vmatprep.subr.mxu0 0.0
    %282 = vmatpush1.xpose.msra.mxu0 0.0
    %283 = vmatprep.subr.mxu0 0.0
    %284 = vmatpush1.xpose.msra.mxu0 0.0
    %285 = vmatprep.subr.mxu0 0.0
    %286 = vmatpush1.xpose.msra.mxu0 0.0
    %287 = vmatprep.subr.mxu0 0.0
    %288 = vmatpush1.xpose.msra.mxu0 0.0
    %289 = vmatprep.subr.mxu0 0.0
    %290 = vmatpush1.xpose.msra.mxu0 0.0
    %291 = vmatprep.subr.mxu0 0.0
    %292 = vmatpush1.xpose.msra.mxu0 0.0
    %293 = vmatprep.subr.mxu0 0.0
    %294 = vmatpush1.xpose.msra.mxu0 0.0
    %295 = vmatprep.subr.mxu0 0.0
    %296 = vmatpush1.xpose.msra.mxu0 0.0
    %297 = vmatprep.mubr.f32.mxu0 %v83
    %298 = vmatmul.mubr.f32.gmra.mrb[0].mxu0 %v75
    %v299 = vpop.f32.mrb[0].mxu0
    %v300 = vadd.f32 %v230, %v299
    %v301 = vpop.f32.mrb[0].mxu0
    %302 = vdwg.mxu0
    %303 = vmatprep.subr.mxu0 %v84
    %304 = vmatpush1.xpose.msra.mxu0 %v82
    %305 = vmatprep.subr.mxu0 0.0
    %306 = vmatpush1.xpose.msra.mxu0 0.0
    %307 = vmatprep.subr.mxu0 0.0
    %308 = vmatpush1.xpose.msra.mxu0 0.0
    %309 = vmatprep.subr.mxu0 0.0
    %310 = vmatpush1.xpose.msra.mxu0 0.0
    %311 = vmatprep.subr.mxu0 0.0
    %312 = vmatpush1.xpose.msra.mxu0 0.0
    %313 = vmatprep.subr.mxu0 0.0
    %314 = vmatpush1.xpose.msra.mxu0 0.0
    %315 = vmatprep.subr.mxu0 0.0
    %316 = vmatpush1.xpose.msra.mxu0 0.0
    %317 = vmatprep.subr.mxu0 0.0
    %318 = vmatpush1.xpose.msra.mxu0 0.0
    %319 = vmatprep.subr.mxu0 0.0
    %320 = vmatpush1.xpose.msra.mxu0 0.0
    %321 = vmatprep.subr.mxu0 0.0
    %322 = vmatpush1.xpose.msra.mxu0 0.0
    %323 = vmatprep.subr.mxu0 0.0
    %324 = vmatpush1.xpose.msra.mxu0 0.0
    %325 = vmatprep.subr.mxu0 0.0
    %326 = vmatpush1.xpose.msra.mxu0 0.0
    %327 = vmatprep.subr.mxu0 0.0
    %328 = vmatpush1.xpose.msra.mxu0 0.0
    %329 = vmatprep.subr.mxu0 0.0
    %330 = vmatpush1.xpose.msra.mxu0 0.0
    %331 = vmatprep.subr.mxu0 0.0
    %332 = vmatpush1.xpose.msra.mxu0 0.0
    %333 = vmatprep.subr.mxu0 0.0
    %334 = vmatpush1.xpose.msra.mxu0 0.0
    %335 = vmatprep.subr.mxu0 0.0
    %336 = vmatpush1.xpose.msra.mxu0 0.0
    %337 = vmatprep.subr.mxu0 0.0
    %338 = vmatpush1.xpose.msra.mxu0 0.0
    %339 = vmatprep.subr.mxu0 0.0
    %340 = vmatpush1.xpose.msra.mxu0 0.0
    %341 = vmatprep.subr.mxu0 0.0
    %342 = vmatpush1.xpose.msra.mxu0 0.0
    %343 = vmatprep.subr.mxu0 0.0
    %344 = vmatpush1.xpose.msra.mxu0 0.0
    %345 = vmatprep.subr.mxu0 0.0
    %346 = vmatpush1.xpose.msra.mxu0 0.0
    %347 = vmatprep.subr.mxu0 0.0
    %348 = vmatpush1.xpose.msra.mxu0 0.0
    %349 = vmatprep.subr.mxu0 0.0
    %350 = vmatpush1.xpose.msra.mxu0 0.0
    %351 = vmatprep.subr.mxu0 0.0
    %352 = vmatpush1.xpose.msra.mxu0 0.0
    %353 = vmatprep.subr.mxu0 0.0
    %354 = vmatpush1.xpose.msra.mxu0 0.0
    %355 = vmatprep.subr.mxu0 0.0
    %356 = vmatpush1.xpose.msra.mxu0 0.0
    %357 = vmatprep.subr.mxu0 0.0
    %358 = vmatpush1.xpose.msra.mxu0 0.0
    %359 = vmatprep.subr.mxu0 0.0
    %360 = vmatpush1.xpose.msra.mxu0 0.0
    %361 = vmatprep.subr.mxu0 0.0
    %362 = vmatpush1.xpose.msra.mxu0 0.0
    %363 = vmatprep.subr.mxu0 0.0
    %364 = vmatpush1.xpose.msra.mxu0 0.0
    %365 = vmatprep.subr.mxu0 0.0
    %366 = vmatpush1.xpose.msra.mxu0 0.0
    %367 = vmatprep.mubr.f32.mxu0 %v84
    %368 = vmatmul.mubr.f32.gmra.mrb[0].mxu0 %v82
    %v369 = vpop.f32.mrb[0].mxu0
    %v370 = vadd.f32 %v300, %v369
    %v371 = vpop.f32.mrb[0].mxu0
    %372 = vdwg.mxu0
    %v373 = vadd.f32 %v48, %v370
    %vm374 = vcmask 9216
    %375 = vst.msk [vmem:[#allocation2] sm:$0x3] %vm374, %v373
    %v376 = vld [vmem:[#allocation3] sm:$0x3]
    %v379 = vcombine.high %v46, %v46
    %v381 = vunpack.c.l.s4 1983009808
    %v382 = vunpack.c.0.s8 %v381
    %v383 = vlaneseq
    %v384 = vshrl.u32 %v383, 7
    %v385 = vsub.s32 %v382, %v384
    %v386 = vrot.slane %v46, %v385
    %v388 = vunpack.c.l.s4 1983009808
    %v389 = vunpack.c.0.s8 %v388
    %v390 = vlaneseq
    %v391 = vshrl.u32 %v390, 7
    %v392 = vsub.s32 %v389, %v391
    %v393 = vrot.slane %v379, %v392
    %v394 = vcombine.high %v386, %v386
    %v395 = vcombine.high %v393, %v393
    %v396 = vcombine.high %v47, %v47
    %v398 = vunpack.c.l.s4 1983009808
    %v399 = vunpack.c.0.s8 %v398
    %v400 = vlaneseq
    %v401 = vshrl.u32 %v400, 7
    %v402 = vsub.s32 %v399, %v401
    %v403 = vrot.slane %v47, %v402
    %v405 = vunpack.c.l.s4 1983009808
    %v406 = vunpack.c.0.s8 %v405
    %v407 = vlaneseq
    %v408 = vshrl.u32 %v407, 7
    %v409 = vsub.s32 %v406, %v408
    %v410 = vrot.slane %v396, %v409
    %v411 = vcombine.high %v403, %v403
    %v412 = vcombine.high %v410, %v410
    %421 = vmatprep.subr.mxu0 %v394
    %422 = vmatpush1.xpose.msra.mxu0 %v386
    %423 = vmatprep.subr.mxu0 0.0
    %424 = vmatpush1.xpose.msra.mxu0 0.0
    %425 = vmatprep.subr.mxu0 0.0
    %426 = vmatpush1.xpose.msra.mxu0 0.0
    %427 = vmatprep.subr.mxu0 0.0
    %428 = vmatpush1.xpose.msra.mxu0 0.0
    %429 = vmatprep.subr.mxu0 0.0
    %430 = vmatpush1.xpose.msra.mxu0 0.0
    %431 = vmatprep.subr.mxu0 0.0
    %432 = vmatpush1.xpose.msra.mxu0 0.0
    %433 = vmatprep.subr.mxu0 0.0
    %434 = vmatpush1.xpose.msra.mxu0 0.0
    %435 = vmatprep.subr.mxu0 0.0
    %436 = vmatpush1.xpose.msra.mxu0 0.0
    %437 = vmatprep.subr.mxu0 0.0
    %438 = vmatpush1.xpose.msra.mxu0 0.0
    %439 = vmatprep.subr.mxu0 0.0
    %440 = vmatpush1.xpose.msra.mxu0 0.0
    %441 = vmatprep.subr.mxu0 0.0
    %442 = vmatpush1.xpose.msra.mxu0 0.0
    %443 = vmatprep.subr.mxu0 0.0
    %444 = vmatpush1.xpose.msra.mxu0 0.0
    %445 = vmatprep.subr.mxu0 0.0
    %446 = vmatpush1.xpose.msra.mxu0 0.0
    %447 = vmatprep.subr.mxu0 0.0
    %448 = vmatpush1.xpose.msra.mxu0 0.0
    %449 = vmatprep.subr.mxu0 0.0
    %450 = vmatpush1.xpose.msra.mxu0 0.0
    %451 = vmatprep.subr.mxu0 0.0
    %452 = vmatpush1.xpose.msra.mxu0 0.0
    %453 = vmatprep.subr.mxu0 0.0
    %454 = vmatpush1.xpose.msra.mxu0 0.0
    %455 = vmatprep.subr.mxu0 0.0
    %456 = vmatpush1.xpose.msra.mxu0 0.0
    %457 = vmatprep.subr.mxu0 0.0
    %458 = vmatpush1.xpose.msra.mxu0 0.0
    %459 = vmatprep.subr.mxu0 0.0
    %460 = vmatpush1.xpose.msra.mxu0 0.0
    %461 = vmatprep.subr.mxu0 0.0
    %462 = vmatpush1.xpose.msra.mxu0 0.0
    %463 = vmatprep.subr.mxu0 0.0
    %464 = vmatpush1.xpose.msra.mxu0 0.0
    %465 = vmatprep.subr.mxu0 0.0
    %466 = vmatpush1.xpose.msra.mxu0 0.0
    %467 = vmatprep.subr.mxu0 0.0
    %468 = vmatpush1.xpose.msra.mxu0 0.0
    %469 = vmatprep.subr.mxu0 0.0
    %470 = vmatpush1.xpose.msra.mxu0 0.0
    %471 = vmatprep.subr.mxu0 0.0
    %472 = vmatpush1.xpose.msra.mxu0 0.0
    %473 = vmatprep.subr.mxu0 0.0
    %474 = vmatpush1.xpose.msra.mxu0 0.0
    %475 = vmatprep.subr.mxu0 0.0
    %476 = vmatpush1.xpose.msra.mxu0 0.0
    %477 = vmatprep.subr.mxu0 0.0
    %478 = vmatpush1.xpose.msra.mxu0 0.0
    %479 = vmatprep.subr.mxu0 0.0
    %480 = vmatpush1.xpose.msra.mxu0 0.0
    %481 = vmatprep.subr.mxu0 0.0
    %482 = vmatpush1.xpose.msra.mxu0 0.0
    %483 = vmatprep.subr.mxu0 0.0
    %484 = vmatpush1.xpose.msra.mxu0 0.0
    %485 = vmatprep.mubr.f32.mxu0 %v394
    %486 = vmatmul.mubr.f32.gmra.mrb[0].mxu0 %v386
    %v487 = vpop.f32.mrb[0].mxu0
    %v488 = vadd.f32 0.0, %v487
    %v489 = vpop.f32.mrb[0].mxu0
    %490 = vdwg.mxu0
    %491 = vmatprep.subr.mxu0 %v395
    %492 = vmatpush1.xpose.msra.mxu0 %v393
    %493 = vmatprep.subr.mxu0 0.0
    %494 = vmatpush1.xpose.msra.mxu0 0.0
    %495 = vmatprep.subr.mxu0 0.0
    %496 = vmatpush1.xpose.msra.mxu0 0.0
    %497 = vmatprep.subr.mxu0 0.0
    %498 = vmatpush1.xpose.msra.mxu0 0.0
    %499 = vmatprep.subr.mxu0 0.0
    %500 = vmatpush1.xpose.msra.mxu0 0.0
    %501 = vmatprep.subr.mxu0 0.0
    %502 = vmatpush1.xpose.msra.mxu0 0.0
    %503 = vmatprep.subr.mxu0 0.0
    %504 = vmatpush1.xpose.msra.mxu0 0.0
    %505 = vmatprep.subr.mxu0 0.0
    %506 = vmatpush1.xpose.msra.mxu0 0.0
    %507 = vmatprep.subr.mxu0 0.0
    %508 = vmatpush1.xpose.msra.mxu0 0.0
    %509 = vmatprep.subr.mxu0 0.0
    %510 = vmatpush1.xpose.msra.mxu0 0.0
    %511 = vmatprep.subr.mxu0 0.0
    %512 = vmatpush1.xpose.msra.mxu0 0.0
    %513 = vmatprep.subr.mxu0 0.0
    %514 = vmatpush1.xpose.msra.mxu0 0.0
    %515 = vmatprep.subr.mxu0 0.0
    %516 = vmatpush1.xpose.msra.mxu0 0.0
    %517 = vmatprep.subr.mxu0 0.0
    %518 = vmatpush1.xpose.msra.mxu0 0.0
    %519 = vmatprep.subr.mxu0 0.0
    %520 = vmatpush1.xpose.msra.mxu0 0.0
    %521 = vmatprep.subr.mxu0 0.0
    %522 = vmatpush1.xpose.msra.mxu0 0.0
    %523 = vmatprep.subr.mxu0 0.0
    %524 = vmatpush1.xpose.msra.mxu0 0.0
    %525 = vmatprep.subr.mxu0 0.0
    %526 = vmatpush1.xpose.msra.mxu0 0.0
    %527 = vmatprep.subr.mxu0 0.0
    %528 = vmatpush1.xpose.msra.mxu0 0.0
    %529 = vmatprep.subr.mxu0 0.0
    %530 = vmatpush1.xpose.msra.mxu0 0.0
    %531 = vmatprep.subr.mxu0 0.0
    %532 = vmatpush1.xpose.msra.mxu0 0.0
    %533 = vmatprep.subr.mxu0 0.0
    %534 = vmatpush1.xpose.msra.mxu0 0.0
    %535 = vmatprep.subr.mxu0 0.0
    %536 = vmatpush1.xpose.msra.mxu0 0.0
    %537 = vmatprep.subr.mxu0 0.0
    %538 = vmatpush1.xpose.msra.mxu0 0.0
    %539 = vmatprep.subr.mxu0 0.0
    %540 = vmatpush1.xpose.msra.mxu0 0.0
    %541 = vmatprep.subr.mxu0 0.0
    %542 = vmatpush1.xpose.msra.mxu0 0.0
    %543 = vmatprep.subr.mxu0 0.0
    %544 = vmatpush1.xpose.msra.mxu0 0.0
    %545 = vmatprep.subr.mxu0 0.0
    %546 = vmatpush1.xpose.msra.mxu0 0.0
    %547 = vmatprep.subr.mxu0 0.0
    %548 = vmatpush1.xpose.msra.mxu0 0.0
    %549 = vmatprep.subr.mxu0 0.0
    %550 = vmatpush1.xpose.msra.mxu0 0.0
    %551 = vmatprep.subr.mxu0 0.0
    %552 = vmatpush1.xpose.msra.mxu0 0.0
    %553 = vmatprep.subr.mxu0 0.0
    %554 = vmatpush1.xpose.msra.mxu0 0.0
    %555 = vmatprep.mubr.f32.mxu0 %v395
    %556 = vmatmul.mubr.f32.gmra.mrb[0].mxu0 %v393
    %v557 = vpop.f32.mrb[0].mxu0
    %v558 = vadd.f32 %v488, %v557
    %v559 = vpop.f32.mrb[0].mxu0
    %560 = vdwg.mxu0
    %561 = vmatprep.subr.mxu0 %v411
    %562 = vmatpush1.xpose.msra.mxu0 %v403
    %563 = vmatprep.subr.mxu0 0.0
    %564 = vmatpush1.xpose.msra.mxu0 0.0
    %565 = vmatprep.subr.mxu0 0.0
    %566 = vmatpush1.xpose.msra.mxu0 0.0
    %567 = vmatprep.subr.mxu0 0.0
    %568 = vmatpush1.xpose.msra.mxu0 0.0
    %569 = vmatprep.subr.mxu0 0.0
    %570 = vmatpush1.xpose.msra.mxu0 0.0
    %571 = vmatprep.subr.mxu0 0.0
    %572 = vmatpush1.xpose.msra.mxu0 0.0
    %573 = vmatprep.subr.mxu0 0.0
    %574 = vmatpush1.xpose.msra.mxu0 0.0
    %575 = vmatprep.subr.mxu0 0.0
    %576 = vmatpush1.xpose.msra.mxu0 0.0
    %577 = vmatprep.subr.mxu0 0.0
    %578 = vmatpush1.xpose.msra.mxu0 0.0
    %579 = vmatprep.subr.mxu0 0.0
    %580 = vmatpush1.xpose.msra.mxu0 0.0
    %581 = vmatprep.subr.mxu0 0.0
    %582 = vmatpush1.xpose.msra.mxu0 0.0
    %583 = vmatprep.subr.mxu0 0.0
    %584 = vmatpush1.xpose.msra.mxu0 0.0
    %585 = vmatprep.subr.mxu0 0.0
    %586 = vmatpush1.xpose.msra.mxu0 0.0
    %587 = vmatprep.subr.mxu0 0.0
    %588 = vmatpush1.xpose.msra.mxu0 0.0
    %589 = vmatprep.subr.mxu0 0.0
    %590 = vmatpush1.xpose.msra.mxu0 0.0
    %591 = vmatprep.subr.mxu0 0.0
    %592 = vmatpush1.xpose.msra.mxu0 0.0
    %593 = vmatprep.subr.mxu0 0.0
    %594 = vmatpush1.xpose.msra.mxu0 0.0
    %595 = vmatprep.subr.mxu0 0.0
    %596 = vmatpush1.xpose.msra.mxu0 0.0
    %597 = vmatprep.subr.mxu0 0.0
    %598 = vmatpush1.xpose.msra.mxu0 0.0
    %599 = vmatprep.subr.mxu0 0.0
    %600 = vmatpush1.xpose.msra.mxu0 0.0
    %601 = vmatprep.subr.mxu0 0.0
    %602 = vmatpush1.xpose.msra.mxu0 0.0
    %603 = vmatprep.subr.mxu0 0.0
    %604 = vmatpush1.xpose.msra.mxu0 0.0
    %605 = vmatprep.subr.mxu0 0.0
    %606 = vmatpush1.xpose.msra.mxu0 0.0
    %607 = vmatprep.subr.mxu0 0.0
    %608 = vmatpush1.xpose.msra.mxu0 0.0
    %609 = vmatprep.subr.mxu0 0.0
    %610 = vmatpush1.xpose.msra.mxu0 0.0
    %611 = vmatprep.subr.mxu0 0.0
    %612 = vmatpush1.xpose.msra.mxu0 0.0
    %613 = vmatprep.subr.mxu0 0.0
    %614 = vmatpush1.xpose.msra.mxu0 0.0
    %615 = vmatprep.subr.mxu0 0.0
    %616 = vmatpush1.xpose.msra.mxu0 0.0
    %617 = vmatprep.subr.mxu0 0.0
    %618 = vmatpush1.xpose.msra.mxu0 0.0
    %619 = vmatprep.subr.mxu0 0.0
    %620 = vmatpush1.xpose.msra.mxu0 0.0
    %621 = vmatprep.subr.mxu0 0.0
    %622 = vmatpush1.xpose.msra.mxu0 0.0
    %623 = vmatprep.subr.mxu0 0.0
    %624 = vmatpush1.xpose.msra.mxu0 0.0
    %625 = vmatprep.mubr.f32.mxu0 %v411
    %626 = vmatmul.mubr.f32.gmra.mrb[0].mxu0 %v403
    %v627 = vpop.f32.mrb[0].mxu0
    %v628 = vadd.f32 %v558, %v627
    %v629 = vpop.f32.mrb[0].mxu0
    %630 = vdwg.mxu0
    %631 = vmatprep.subr.mxu0 %v412
    %632 = vmatpush1.xpose.msra.mxu0 %v410
    %633 = vmatprep.subr.mxu0 0.0
    %634 = vmatpush1.xpose.msra.mxu0 0.0
    %635 = vmatprep.subr.mxu0 0.0
    %636 = vmatpush1.xpose.msra.mxu0 0.0
    %637 = vmatprep.subr.mxu0 0.0
    %638 = vmatpush1.xpose.msra.mxu0 0.0
    %639 = vmatprep.subr.mxu0 0.0
    %640 = vmatpush1.xpose.msra.mxu0 0.0
    %641 = vmatprep.subr.mxu0 0.0
    %642 = vmatpush1.xpose.msra.mxu0 0.0
    %643 = vmatprep.subr.mxu0 0.0
    %644 = vmatpush1.xpose.msra.mxu0 0.0
    %645 = vmatprep.subr.mxu0 0.0
    %646 = vmatpush1.xpose.msra.mxu0 0.0
    %647 = vmatprep.subr.mxu0 0.0
    %648 = vmatpush1.xpose.msra.mxu0 0.0
    %649 = vmatprep.subr.mxu0 0.0
    %650 = vmatpush1.xpose.msra.mxu0 0.0
    %651 = vmatprep.subr.mxu0 0.0
    %652 = vmatpush1.xpose.msra.mxu0 0.0
    %653 = vmatprep.subr.mxu0 0.0
    %654 = vmatpush1.xpose.msra.mxu0 0.0
    %655 = vmatprep.subr.mxu0 0.0
    %656 = vmatpush1.xpose.msra.mxu0 0.0
    %657 = vmatprep.subr.mxu0 0.0
    %658 = vmatpush1.xpose.msra.mxu0 0.0
    %659 = vmatprep.subr.mxu0 0.0
    %660 = vmatpush1.xpose.msra.mxu0 0.0
    %661 = vmatprep.subr.mxu0 0.0
    %662 = vmatpush1.xpose.msra.mxu0 0.0
    %663 = vmatprep.subr.mxu0 0.0
    %664 = vmatpush1.xpose.msra.mxu0 0.0
    %665 = vmatprep.subr.mxu0 0.0
    %666 = vmatpush1.xpose.msra.mxu0 0.0
    %667 = vmatprep.subr.mxu0 0.0
    %668 = vmatpush1.xpose.msra.mxu0 0.0
    %669 = vmatprep.subr.mxu0 0.0
    %670 = vmatpush1.xpose.msra.mxu0 0.0
    %671 = vmatprep.subr.mxu0 0.0
    %672 = vmatpush1.xpose.msra.mxu0 0.0
    %673 = vmatprep.subr.mxu0 0.0
    %674 = vmatpush1.xpose.msra.mxu0 0.0
    %675 = vmatprep.subr.mxu0 0.0
    %676 = vmatpush1.xpose.msra.mxu0 0.0
    %677 = vmatprep.subr.mxu0 0.0
    %678 = vmatpush1.xpose.msra.mxu0 0.0
    %679 = vmatprep.subr.mxu0 0.0
    %680 = vmatpush1.xpose.msra.mxu0 0.0
    %681 = vmatprep.subr.mxu0 0.0
    %682 = vmatpush1.xpose.msra.mxu0 0.0
    %683 = vmatprep.subr.mxu0 0.0
    %684 = vmatpush1.xpose.msra.mxu0 0.0
    %685 = vmatprep.subr.mxu0 0.0
    %686 = vmatpush1.xpose.msra.mxu0 0.0
    %687 = vmatprep.subr.mxu0 0.0
    %688 = vmatpush1.xpose.msra.mxu0 0.0
    %689 = vmatprep.subr.mxu0 0.0
    %690 = vmatpush1.xpose.msra.mxu0 0.0
    %691 = vmatprep.subr.mxu0 0.0
    %692 = vmatpush1.xpose.msra.mxu0 0.0
    %693 = vmatprep.subr.mxu0 0.0
    %694 = vmatpush1.xpose.msra.mxu0 0.0
    %695 = vmatprep.mubr.f32.mxu0 %v412
    %696 = vmatmul.mubr.f32.gmra.mrb[0].mxu0 %v410
    %v697 = vpop.f32.mrb[0].mxu0
    %v698 = vadd.f32 %v628, %v697
    %v699 = vpop.f32.mrb[0].mxu0
    %700 = vdwg.mxu0
    %v701 = vadd.f32 %v376, %v698
    %702 = vst.msk [vmem:[#allocation3] sm:$0x3] %vm374, %v701
    %v703 = vld [vmem:[#allocation4] sm:$0x3]
    %704 = vmatprep.subr.mxu0 %v394
    %705 = vmatpush1.xpose.msra.mxu0 %v386
    %706 = vmatprep.subr.mxu0 0.0
    %707 = vmatpush1.xpose.msra.mxu0 0.0
    %708 = vmatprep.subr.mxu0 0.0
    %709 = vmatpush1.xpose.msra.mxu0 0.0
    %710 = vmatprep.subr.mxu0 0.0
    %711 = vmatpush1.xpose.msra.mxu0 0.0
    %712 = vmatprep.subr.mxu0 0.0
    %713 = vmatpush1.xpose.msra.mxu0 0.0
    %714 = vmatprep.subr.mxu0 0.0
    %715 = vmatpush1.xpose.msra.mxu0 0.0
    %716 = vmatprep.subr.mxu0 0.0
    %717 = vmatpush1.xpose.msra.mxu0 0.0
    %718 = vmatprep.subr.mxu0 0.0
    %719 = vmatpush1.xpose.msra.mxu0 0.0
    %720 = vmatprep.subr.mxu0 0.0
    %721 = vmatpush1.xpose.msra.mxu0 0.0
    %722 = vmatprep.subr.mxu0 0.0
    %723 = vmatpush1.xpose.msra.mxu0 0.0
    %724 = vmatprep.subr.mxu0 0.0
    %725 = vmatpush1.xpose.msra.mxu0 0.0
    %726 = vmatprep.subr.mxu0 0.0
    %727 = vmatpush1.xpose.msra.mxu0 0.0
    %728 = vmatprep.subr.mxu0 0.0
    %729 = vmatpush1.xpose.msra.mxu0 0.0
    %730 = vmatprep.subr.mxu0 0.0
    %731 = vmatpush1.xpose.msra.mxu0 0.0
    %732 = vmatprep.subr.mxu0 0.0
    %733 = vmatpush1.xpose.msra.mxu0 0.0
    %734 = vmatprep.subr.mxu0 0.0
    %735 = vmatpush1.xpose.msra.mxu0 0.0
    %736 = vmatprep.subr.mxu0 0.0
    %737 = vmatpush1.xpose.msra.mxu0 0.0
    %738 = vmatprep.subr.mxu0 0.0
    %739 = vmatpush1.xpose.msra.mxu0 0.0
    %740 = vmatprep.subr.mxu0 0.0
    %741 = vmatpush1.xpose.msra.mxu0 0.0
    %742 = vmatprep.subr.mxu0 0.0
    %743 = vmatpush1.xpose.msra.mxu0 0.0
    %744 = vmatprep.subr.mxu0 0.0
    %745 = vmatpush1.xpose.msra.mxu0 0.0
    %746 = vmatprep.subr.mxu0 0.0
    %747 = vmatpush1.xpose.msra.mxu0 0.0
    %748 = vmatprep.subr.mxu0 0.0
    %749 = vmatpush1.xpose.msra.mxu0 0.0
    %750 = vmatprep.subr.mxu0 0.0
    %751 = vmatpush1.xpose.msra.mxu0 0.0
    %752 = vmatprep.subr.mxu0 0.0
    %753 = vmatpush1.xpose.msra.mxu0 0.0
    %754 = vmatprep.subr.mxu0 0.0
    %755 = vmatpush1.xpose.msra.mxu0 0.0
    %756 = vmatprep.subr.mxu0 0.0
    %757 = vmatpush1.xpose.msra.mxu0 0.0
    %758 = vmatprep.subr.mxu0 0.0
    %759 = vmatpush1.xpose.msra.mxu0 0.0
    %760 = vmatprep.subr.mxu0 0.0
    %761 = vmatpush1.xpose.msra.mxu0 0.0
    %762 = vmatprep.subr.mxu0 0.0
    %763 = vmatpush1.xpose.msra.mxu0 0.0
    %764 = vmatprep.subr.mxu0 0.0
    %765 = vmatpush1.xpose.msra.mxu0 0.0
    %766 = vmatprep.subr.mxu0 0.0
    %767 = vmatpush1.xpose.msra.mxu0 0.0
    %768 = vmatprep.mubr.f32.mxu0 %v66
    %769 = vmatmul.mubr.f32.gmra.mrb[0].mxu0 %v58
    %v770 = vpop.f32.mrb[0].mxu0
    %v771 = vadd.f32 0.0, %v770
    %v772 = vpop.f32.mrb[0].mxu0
    %773 = vdwg.mxu0
    %774 = vmatprep.subr.mxu0 %v395
    %775 = vmatpush1.xpose.msra.mxu0 %v393
    %776 = vmatprep.subr.mxu0 0.0
    %777 = vmatpush1.xpose.msra.mxu0 0.0
    %778 = vmatprep.subr.mxu0 0.0
    %779 = vmatpush1.xpose.msra.mxu0 0.0
    %780 = vmatprep.subr.mxu0 0.0
    %781 = vmatpush1.xpose.msra.mxu0 0.0
    %782 = vmatprep.subr.mxu0 0.0
    %783 = vmatpush1.xpose.msra.mxu0 0.0
    %784 = vmatprep.subr.mxu0 0.0
    %785 = vmatpush1.xpose.msra.mxu0 0.0
    %786 = vmatprep.subr.mxu0 0.0
    %787 = vmatpush1.xpose.msra.mxu0 0.0
    %788 = vmatprep.subr.mxu0 0.0
    %789 = vmatpush1.xpose.msra.mxu0 0.0
    %790 = vmatprep.subr.mxu0 0.0
    %791 = vmatpush1.xpose.msra.mxu0 0.0
    %792 = vmatprep.subr.mxu0 0.0
    %793 = vmatpush1.xpose.msra.mxu0 0.0
    %794 = vmatprep.subr.mxu0 0.0
    %795 = vmatpush1.xpose.msra.mxu0 0.0
    %796 = vmatprep.subr.mxu0 0.0
    %797 = vmatpush1.xpose.msra.mxu0 0.0
    %798 = vmatprep.subr.mxu0 0.0
    %799 = vmatpush1.xpose.msra.mxu0 0.0
    %800 = vmatprep.subr.mxu0 0.0
    %801 = vmatpush1.xpose.msra.mxu0 0.0
    %802 = vmatprep.subr.mxu0 0.0
    %803 = vmatpush1.xpose.msra.mxu0 0.0
    %804 = vmatprep.subr.mxu0 0.0
    %805 = vmatpush1.xpose.msra.mxu0 0.0
    %806 = vmatprep.subr.mxu0 0.0
    %807 = vmatpush1.xpose.msra.mxu0 0.0
    %808 = vmatprep.subr.mxu0 0.0
    %809 = vmatpush1.xpose.msra.mxu0 0.0
    %810 = vmatprep.subr.mxu0 0.0
    %811 = vmatpush1.xpose.msra.mxu0 0.0
    %812 = vmatprep.subr.mxu0 0.0
    %813 = vmatpush1.xpose.msra.mxu0 0.0
    %814 = vmatprep.subr.mxu0 0.0
    %815 = vmatpush1.xpose.msra.mxu0 0.0
    %816 = vmatprep.subr.mxu0 0.0
    %817 = vmatpush1.xpose.msra.mxu0 0.0
    %818 = vmatprep.subr.mxu0 0.0
    %819 = vmatpush1.xpose.msra.mxu0 0.0
    %820 = vmatprep.subr.mxu0 0.0
    %821 = vmatpush1.xpose.msra.mxu0 0.0
    %822 = vmatprep.subr.mxu0 0.0
    %823 = vmatpush1.xpose.msra.mxu0 0.0
    %824 = vmatprep.subr.mxu0 0.0
    %825 = vmatpush1.xpose.msra.mxu0 0.0
    %826 = vmatprep.subr.mxu0 0.0
    %827 = vmatpush1.xpose.msra.mxu0 0.0
    %828 = vmatprep.subr.mxu0 0.0
    %829 = vmatpush1.xpose.msra.mxu0 0.0
    %830 = vmatprep.subr.mxu0 0.0
    %831 = vmatpush1.xpose.msra.mxu0 0.0
    %832 = vmatprep.subr.mxu0 0.0
    %833 = vmatpush1.xpose.msra.mxu0 0.0
    %834 = vmatprep.subr.mxu0 0.0
    %835 = vmatpush1.xpose.msra.mxu0 0.0
    %836 = vmatprep.subr.mxu0 0.0
    %837 = vmatpush1.xpose.msra.mxu0 0.0
    %838 = vmatprep.mubr.f32.mxu0 %v67
    %839 = vmatmul.mubr.f32.gmra.mrb[0].mxu0 %v65
    %v840 = vpop.f32.mrb[0].mxu0
    %v841 = vadd.f32 %v771, %v840
    %v842 = vpop.f32.mrb[0].mxu0
    %843 = vdwg.mxu0
    %844 = vmatprep.subr.mxu0 %v411
    %845 = vmatpush1.xpose.msra.mxu0 %v403
    %846 = vmatprep.subr.mxu0 0.0
    %847 = vmatpush1.xpose.msra.mxu0 0.0
    %848 = vmatprep.subr.mxu0 0.0
    %849 = vmatpush1.xpose.msra.mxu0 0.0
    %850 = vmatprep.subr.mxu0 0.0
    %851 = vmatpush1.xpose.msra.mxu0 0.0
    %852 = vmatprep.subr.mxu0 0.0
    %853 = vmatpush1.xpose.msra.mxu0 0.0
    %854 = vmatprep.subr.mxu0 0.0
    %855 = vmatpush1.xpose.msra.mxu0 0.0
    %856 = vmatprep.subr.mxu0 0.0
    %857 = vmatpush1.xpose.msra.mxu0 0.0
    %858 = vmatprep.subr.mxu0 0.0
    %859 = vmatpush1.xpose.msra.mxu0 0.0
    %860 = vmatprep.subr.mxu0 0.0
    %861 = vmatpush1.xpose.msra.mxu0 0.0
    %862 = vmatprep.subr.mxu0 0.0
    %863 = vmatpush1.xpose.msra.mxu0 0.0
    %864 = vmatprep.subr.mxu0 0.0
    %865 = vmatpush1.xpose.msra.mxu0 0.0
    %866 = vmatprep.subr.mxu0 0.0
    %867 = vmatpush1.xpose.msra.mxu0 0.0
    %868 = vmatprep.subr.mxu0 0.0
    %869 = vmatpush1.xpose.msra.mxu0 0.0
    %870 = vmatprep.subr.mxu0 0.0
    %871 = vmatpush1.xpose.msra.mxu0 0.0
    %872 = vmatprep.subr.mxu0 0.0
    %873 = vmatpush1.xpose.msra.mxu0 0.0
    %874 = vmatprep.subr.mxu0 0.0
    %875 = vmatpush1.xpose.msra.mxu0 0.0
    %876 = vmatprep.subr.mxu0 0.0
    %877 = vmatpush1.xpose.msra.mxu0 0.0
    %878 = vmatprep.subr.mxu0 0.0
    %879 = vmatpush1.xpose.msra.mxu0 0.0
    %880 = vmatprep.subr.mxu0 0.0
    %881 = vmatpush1.xpose.msra.mxu0 0.0
    %882 = vmatprep.subr.mxu0 0.0
    %883 = vmatpush1.xpose.msra.mxu0 0.0
    %884 = vmatprep.subr.mxu0 0.0
    %885 = vmatpush1.xpose.msra.mxu0 0.0
    %886 = vmatprep.subr.mxu0 0.0
    %887 = vmatpush1.xpose.msra.mxu0 0.0
    %888 = vmatprep.subr.mxu0 0.0
    %889 = vmatpush1.xpose.msra.mxu0 0.0
    %890 = vmatprep.subr.mxu0 0.0
    %891 = vmatpush1.xpose.msra.mxu0 0.0
    %892 = vmatprep.subr.mxu0 0.0
    %893 = vmatpush1.xpose.msra.mxu0 0.0
    %894 = vmatprep.subr.mxu0 0.0
    %895 = vmatpush1.xpose.msra.mxu0 0.0
    %896 = vmatprep.subr.mxu0 0.0
    %897 = vmatpush1.xpose.msra.mxu0 0.0
    %898 = vmatprep.subr.mxu0 0.0
    %899 = vmatpush1.xpose.msra.mxu0 0.0
    %900 = vmatprep.subr.mxu0 0.0
    %901 = vmatpush1.xpose.msra.mxu0 0.0
    %902 = vmatprep.subr.mxu0 0.0
    %903 = vmatpush1.xpose.msra.mxu0 0.0
    %904 = vmatprep.subr.mxu0 0.0
    %905 = vmatpush1.xpose.msra.mxu0 0.0
    %906 = vmatprep.subr.mxu0 0.0
    %907 = vmatpush1.xpose.msra.mxu0 0.0
    %908 = vmatprep.mubr.f32.mxu0 %v83
    %909 = vmatmul.mubr.f32.gmra.mrb[0].mxu0 %v75
    %v910 = vpop.f32.mrb[0].mxu0
    %v911 = vadd.f32 %v841, %v910
    %v912 = vpop.f32.mrb[0].mxu0
    %913 = vdwg.mxu0
    %914 = vmatprep.subr.mxu0 %v412
    %915 = vmatpush1.xpose.msra.mxu0 %v410
    %916 = vmatprep.subr.mxu0 0.0
    %917 = vmatpush1.xpose.msra.mxu0 0.0
    %918 = vmatprep.subr.mxu0 0.0
    %919 = vmatpush1.xpose.msra.mxu0 0.0
    %920 = vmatprep.subr.mxu0 0.0
    %921 = vmatpush1.xpose.msra.mxu0 0.0
    %922 = vmatprep.subr.mxu0 0.0
    %923 = vmatpush1.xpose.msra.mxu0 0.0
    %924 = vmatprep.subr.mxu0 0.0
    %925 = vmatpush1.xpose.msra.mxu0 0.0
    %926 = vmatprep.subr.mxu0 0.0
    %927 = vmatpush1.xpose.msra.mxu0 0.0
    %928 = vmatprep.subr.mxu0 0.0
    %929 = vmatpush1.xpose.msra.mxu0 0.0
    %930 = vmatprep.subr.mxu0 0.0
    %931 = vmatpush1.xpose.msra.mxu0 0.0
    %932 = vmatprep.subr.mxu0 0.0
    %933 = vmatpush1.xpose.msra.mxu0 0.0
    %934 = vmatprep.subr.mxu0 0.0
    %935 = vmatpush1.xpose.msra.mxu0 0.0
    %936 = vmatprep.subr.mxu0 0.0
    %937 = vmatpush1.xpose.msra.mxu0 0.0
    %938 = vmatprep.subr.mxu0 0.0
    %939 = vmatpush1.xpose.msra.mxu0 0.0
    %940 = vmatprep.subr.mxu0 0.0
    %941 = vmatpush1.xpose.msra.mxu0 0.0
    %942 = vmatprep.subr.mxu0 0.0
    %943 = vmatpush1.xpose.msra.mxu0 0.0
    %944 = vmatprep.subr.mxu0 0.0
    %945 = vmatpush1.xpose.msra.mxu0 0.0
    %946 = vmatprep.subr.mxu0 0.0
    %947 = vmatpush1.xpose.msra.mxu0 0.0
    %948 = vmatprep.subr.mxu0 0.0
    %949 = vmatpush1.xpose.msra.mxu0 0.0
    %950 = vmatprep.subr.mxu0 0.0
    %951 = vmatpush1.xpose.msra.mxu0 0.0
    %952 = vmatprep.subr.mxu0 0.0
    %953 = vmatpush1.xpose.msra.mxu0 0.0
    %954 = vmatprep.subr.mxu0 0.0
    %955 = vmatpush1.xpose.msra.mxu0 0.0
    %956 = vmatprep.subr.mxu0 0.0
    %957 = vmatpush1.xpose.msra.mxu0 0.0
    %958 = vmatprep.subr.mxu0 0.0
    %959 = vmatpush1.xpose.msra.mxu0 0.0
    %960 = vmatprep.subr.mxu0 0.0
    %961 = vmatpush1.xpose.msra.mxu0 0.0
    %962 = vmatprep.subr.mxu0 0.0
    %963 = vmatpush1.xpose.msra.mxu0 0.0
    %964 = vmatprep.subr.mxu0 0.0
    %965 = vmatpush1.xpose.msra.mxu0 0.0
    %966 = vmatprep.subr.mxu0 0.0
    %967 = vmatpush1.xpose.msra.mxu0 0.0
    %968 = vmatprep.subr.mxu0 0.0
    %969 = vmatpush1.xpose.msra.mxu0 0.0
    %970 = vmatprep.subr.mxu0 0.0
    %971 = vmatpush1.xpose.msra.mxu0 0.0
    %972 = vmatprep.subr.mxu0 0.0
    %973 = vmatpush1.xpose.msra.mxu0 0.0
    %974 = vmatprep.subr.mxu0 0.0
    %975 = vmatpush1.xpose.msra.mxu0 0.0
    %976 = vmatprep.subr.mxu0 0.0
    %977 = vmatpush1.xpose.msra.mxu0 0.0
    %978 = vmatprep.mubr.f32.mxu0 %v84
    %979 = vmatmul.mubr.f32.gmra.mrb[0].mxu0 %v82
    %v980 = vpop.f32.mrb[0].mxu0
    %v981 = vadd.f32 %v911, %v980
    %v982 = vpop.f32.mrb[0].mxu0
    %983 = vdwg.mxu0
    %v984 = vadd.f32 %v703, %v981
    %985 = vst.msk [vmem:[#allocation4] sm:$0x3] %vm374, %v984
    // Predicated region
    $region22: #{tpu_custom_call.1} parent=1 // pred_check
      %p986 = pneg %p36
    $region23: #{tpu_custom_call.1} parent=1 // pred_check_branch
      %988 = sbr.rel (%p986) target = $region25
    $region24: #{tpu_custom_call.1} parent=1 // pred_region
      %v989 = vld [vmem:[#allocation2] sm:$0x3]
      %v990 = vld [vmem:[#allocation3] sm:$0x3]
      %v991 = vld [vmem:[#allocation4] sm:$0x3]
      %v992 = vlaneseq
      %v993 = vshrl.u32 %v992, 7
      %v994 = vlaneseq
      %v995 = vand.u32 %v994, 127
      %vm996 = vcmp.eq.s32.totalorder %v993, %v995
      %v997 = vsel %vm996, %v989, 0.0
      %v998 = vsel %vm374, %v997, 0.0
      %999 = vadd.xlane.f32.xlu0 %v998
      %v1000 = vpop.xlane.xlu0 %999
      %v1001 = vsel %vm996, %v990, 0.0
      %v1002 = vsel %vm374, %v1001, 0.0
      %1003 = vadd.xlane.f32.xlu0 %v1002
      %v1004 = vpop.xlane.xlu0 %1003
      %1005 = vxpose.xlu0.b32.start [1/16] %v1000, 128
      %1006 = vxpose.xlu0.b32.cont [2/16] 0.0, 128
      %1007 = vxpose.xlu0.b32.cont [3/16] 0.0, 128
      %1008 = vxpose.xlu0.b32.cont [4/16] 0.0, 128
      %1009 = vxpose.xlu0.b32.cont [5/16] 0.0, 128
      %1010 = vxpose.xlu0.b32.cont [6/16] 0.0, 128
      %1011 = vxpose.xlu0.b32.cont [7/16] 0.0, 128
      %1012 = vxpose.xlu0.b32.cont [8/16] 0.0, 128
      %1013 = vxpose.xlu0.b32.cont [9/16] 0.0, 128
      %1014 = vxpose.xlu0.b32.cont [10/16] 0.0, 128
      %1015 = vxpose.xlu0.b32.cont [11/16] 0.0, 128
      %1016 = vxpose.xlu0.b32.cont [12/16] 0.0, 128
      %1017 = vxpose.xlu0.b32.cont [13/16] 0.0, 128
      %1018 = vxpose.xlu0.b32.cont [14/16] 0.0, 128
      %1019 = vxpose.xlu0.b32.cont [15/16] 0.0, 128
      %1020 = vxpose.xlu0.b32.end [16/16] 0.0, 128
      %v1021 = vpop.trf.xlu0
      %v1022 = vpop.trf.xlu0
      %v1023 = vpop.trf.xlu0
      %v1024 = vpop.trf.xlu0
      %v1025 = vpop.trf.xlu0
      %v1026 = vpop.trf.xlu0
      %v1027 = vpop.trf.xlu0
      %v1028 = vpop.trf.xlu0
      %v1029 = vpop.trf.xlu0
      %v1030 = vpop.trf.xlu0
      %v1031 = vpop.trf.xlu0
      %v1032 = vpop.trf.xlu0
      %v1033 = vpop.trf.xlu0
      %v1034 = vpop.trf.xlu0
      %v1035 = vpop.trf.xlu0
      %v1036 = vpop.trf.xlu0
      %v1037 = vlaneseq
      %v1038 = vshrl.u32 %v1037, 7
      %v1039 = vsub.s32 0, %v1038
      %v1040 = vrot.slane %v1021, %v1039
      %v1041 = vadd.f32 %v1000, %v1040
      %v1042 = vmul.f32 %v989, 2.0
      %v1043 = vsub.f32 %v1041, %v1042
      %v1044 = vmul.f32 %v1043, -50.0
      %v1045 = vmul.f32 %v1044, 1.442695
      %v1046 = vpow.pop %v1045
      %1047 = vxpose.xlu0.b32.start [1/16] %v1004, 128
      %1048 = vxpose.xlu0.b32.cont [2/16] 0.0, 128
      %1049 = vxpose.xlu0.b32.cont [3/16] 0.0, 128
      %1050 = vxpose.xlu0.b32.cont [4/16] 0.0, 128
      %1051 = vxpose.xlu0.b32.cont [5/16] 0.0, 128
      %1052 = vxpose.xlu0.b32.cont [6/16] 0.0, 128
      %1053 = vxpose.xlu0.b32.cont [7/16] 0.0, 128
      %1054 = vxpose.xlu0.b32.cont [8/16] 0.0, 128
      %1055 = vxpose.xlu0.b32.cont [9/16] 0.0, 128
      %1056 = vxpose.xlu0.b32.cont [10/16] 0.0, 128
      %1057 = vxpose.xlu0.b32.cont [11/16] 0.0, 128
      %1058 = vxpose.xlu0.b32.cont [12/16] 0.0, 128
      %1059 = vxpose.xlu0.b32.cont [13/16] 0.0, 128
      %1060 = vxpose.xlu0.b32.cont [14/16] 0.0, 128
      %1061 = vxpose.xlu0.b32.cont [15/16] 0.0, 128
      %1062 = vxpose.xlu0.b32.end [16/16] 0.0, 128
      %v1063 = vpop.trf.xlu0
      %v1064 = vpop.trf.xlu0
      %v1065 = vpop.trf.xlu0
      %v1066 = vpop.trf.xlu0
      %v1067 = vpop.trf.xlu0
      %v1068 = vpop.trf.xlu0
      %v1069 = vpop.trf.xlu0
      %v1070 = vpop.trf.xlu0
      %v1071 = vpop.trf.xlu0
      %v1072 = vpop.trf.xlu0
      %v1073 = vpop.trf.xlu0
      %v1074 = vpop.trf.xlu0
      %v1075 = vpop.trf.xlu0
      %v1076 = vpop.trf.xlu0
      %v1077 = vpop.trf.xlu0
      %v1078 = vpop.trf.xlu0
      %v1079 = vlaneseq
      %v1080 = vshrl.u32 %v1079, 7
      %v1081 = vsub.s32 0, %v1080
      %v1082 = vrot.slane %v1063, %v1081
      %v1083 = vadd.f32 %v1004, %v1082
      %v1084 = vmul.f32 %v990, 2.0
      %v1085 = vsub.f32 %v1083, %v1084
      %v1086 = vmul.f32 %v1085, -50.0
      %v1087 = vmul.f32 %v1086, 1.442695
      %v1088 = vpow.pop %v1087
      %v1089 = vadd.f32 %v1000, %v1082
      %v1090 = vmul.f32 %v991, 2.0
      %v1091 = vsub.f32 %v1089, %v1090
      %v1092 = vmul.f32 %v1091, -50.0
      %v1093 = vmul.f32 %v1092, 1.442695
      %v1094 = vpow.pop %v1093
      %v1095 = vsel %vm374, %v1046, 0.0
      %1096 = vadd.xlane.f32.xlu0 %v1095
      %v1097 = vpop.xlane.xlu0 %1096
      %v1098 = vrot.slane %v1097, 4
      %v1099 = vadd.f32 %v1097, %v1098
      %v1100 = vrot.slane %v1099, 2
      %v1101 = vadd.f32 %v1099, %v1100
      %v1102 = vrot.slane %v1101, 1
      %v1103 = vadd.f32 %v1101, %v1102
      %s1104 = vtos %v1103
      %v1105 = vstv %s1104
      %v1106 = vsel %vm374, %v1088, 0.0
      %1107 = vadd.xlane.f32.xlu0 %v1106
      %v1108 = vpop.xlane.xlu0 %1107
      %v1109 = vrot.slane %v1108, 4
      %v1110 = vadd.f32 %v1108, %v1109
      %v1111 = vrot.slane %v1110, 2
      %v1112 = vadd.f32 %v1110, %v1111
      %v1113 = vrot.slane %v1112, 1
      %v1114 = vadd.f32 %v1112, %v1113
      %s1115 = vtos %v1114
      %v1116 = vstv %s1115
      %v1117 = vsel %vm374, %v1094, 0.0
      %1118 = vadd.xlane.f32.xlu0 %v1117
      %v1119 = vpop.xlane.xlu0 %1118
      %v1120 = vrot.slane %v1119, 4
      %v1121 = vadd.f32 %v1119, %v1120
      %v1122 = vrot.slane %v1121, 2
      %v1123 = vadd.f32 %v1121, %v1122
      %v1124 = vrot.slane %v1123, 1
      %v1125 = vadd.f32 %v1123, %v1124
      %s1126 = vtos %v1125
      %v1127 = vstv %s1126
      %v1128 = vadd.f32 %v1105, %v1116
      %v1129 = vmul.f32 %v1128, 0.5
      %v1130 = vmul.f32 %v1127, 0.5
      %v1131 = vsub.f32 %v1129, %v1130
      %vm1132 = vcmask 0
      %1133 = vst.msk [vmem:[#allocation10] sm:$0x1] %vm1132, %v1131
    $region25: #{tpu_custom_call.1} parent=1 // pred_fallthru
      _
    // Predicated region
    $region26: #{tpu_custom_call.1} parent=1 // pred_check
      _
    $region27: #{tpu_custom_call.1} parent=1 // pred_check_branch
      %1135 = sbr.rel (0) target = $region29
    $region28: #{tpu_custom_call.1} parent=1 // pred_region
      %s1137 = ssub.s32 16, 16
      %1138 = vsyncadd [#allocation7], %s1137
      %s1140 = sshll.u32 [#allocation10], 4
      %s1141 = int_to_ptr.vmem [resolvable:$true] %s1140
      %1143 = dma.vmem_to_hbm [thread:$0]  %s1141, 16, %s2, [#allocation7]
    $region29: #{tpu_custom_call.1} parent=1 // pred_fallthru
      _
    // Predicated region
    $region30: #{tpu_custom_call.1} parent=1 // pred_check
      _
    $region31: #{tpu_custom_call.1} parent=1 // pred_check_branch
      %1145 = sbr.rel (0) target = $region33
    $region32: #{tpu_custom_call.1} parent=1 // pred_region
      %1146 = dma.done [#allocation7], 16
    $region33: #{tpu_custom_call.1} parent=1 // pred_fallthru
      _
    %1147 = vsyncpa [#allocation6], 1
    %1148 = vsyncpa [#allocation9], 1
    %1149 = vsyncpa [#allocation7], 1

</llo_original>
